<compile_context>
chip_gen: v7x
topology: tpu7x:2x2x1
jax: 0.10.0
libtpu: 0.0.40
codegen_flags: <defaults>
</compile_context>

<pallas_src>
import functools
import math

import jax
import jax.numpy as jnp
from jax.experimental import pallas as pl
from jax.experimental.pallas import tpu as pltpu

HIDDEN = 100        # nn.Linear(state_dim, 100)
HIDDEN_PAD = 128    # hidden padded to a full lane tile (padding is exact zeros)
OUT_PAD = 128       # packed lane-dense output: [probs(0:A) | value(A) | zeros]


def _round_up(x, m):
    return (x + m - 1) // m * m


def _actor_critic_kernel(x_ref, w1_ref, b1_ref, w2_ref, b2_ref, out_ref,
                         *, action_dim):
    x = x_ref[...]

    # Fused layer 1: one MXU matmul covers both branches.
    #   h[:, 0:HIDDEN_PAD] = actor hidden,  h[:, HIDDEN_PAD:] = critic hidden
    # (padded hidden units are exactly 0 after ReLU: zero weight cols + zero bias)
    h = jnp.dot(x, w1_ref[...], preferred_element_type=jnp.float32) + b1_ref[...]
    h = jnp.maximum(h, 0.0)                                    # ReLU in f32 (VPU)

    # Fused layer 2: one MXU matmul -> packed (TB, OUT_PAD) slab.
    z = jnp.dot(h.astype(w2_ref.dtype), w2_ref[...],
                preferred_element_type=jnp.float32) + b2_ref[...]

    lane = jax.lax.broadcasted_iota(jnp.int32, z.shape, dimension=1)
    is_logit = lane < action_dim

    # Numerically-stable softmax restricted to the first `action_dim` lanes.
    logits = jnp.where(is_logit, z, -jnp.inf)       # padded lanes can't leak
    m = jnp.max(logits, axis=1, keepdims=True)
    e = jnp.exp(logits - m)                          # exp(-inf) = 0 on pad lanes
    denom = jnp.sum(e, axis=1, keepdims=True)        # >= 1, safe to invert
    inv = pl.reciprocal(denom, approx=True)          # EUP vrcp (free slot)
    inv = inv * (2.0 - denom * inv)                  # one Newton step -> f32-exact
    probs = e * inv                                  # zero on non-logit lanes

    # Lane-dense packed store: probs in lanes [0, A), value in lane A, 0 after.
    packed = probs + jnp.where(lane == action_dim, z, 0.0)
    out_ref[...] = packed.astype(out_ref.dtype)


def pack_params(params, action_dim, *, mxu_dtype=jnp.bfloat16):
    """Concatenate + zero-pad the four Linear layers into two fused matrices.

    Default mxu_dtype is bf16 (bf16-native MXUs on v5e/v6e/v7x, halves weight /
    x-stream HBM bytes; accumulation stays f32).  Pass mxu_dtype=jnp.float32 for
    bit-exact PyTorch parity.  Biases are always f32 (VPU/EUP work stays f32).
    """
    assert action_dim + 1 <= OUT_PAD, (
        f"packed layout requires action_dim + 1 <= {OUT_PAD}, got {action_dim}")
    state_dim = params["wa1"].shape[0]

    w1 = jnp.zeros((state_dim, 2 * HIDDEN_PAD), jnp.float32)
    w1 = w1.at[:, :HIDDEN].set(params["wa1"])
    w1 = w1.at[:, HIDDEN_PAD:HIDDEN_PAD + HIDDEN].set(params["wv1"])
    b1 = jnp.zeros((1, 2 * HIDDEN_PAD), jnp.float32)
    b1 = b1.at[:, :HIDDEN].set(params["ba1"])
    b1 = b1.at[:, HIDDEN_PAD:HIDDEN_PAD + HIDDEN].set(params["bv1"])

    w2 = jnp.zeros((2 * HIDDEN_PAD, OUT_PAD), jnp.float32)
    w2 = w2.at[:HIDDEN, :action_dim].set(params["wa2"])
    w2 = w2.at[HIDDEN_PAD:HIDDEN_PAD + HIDDEN,
               action_dim:action_dim + 1].set(params["wv2"])
    b2 = jnp.zeros((1, OUT_PAD), jnp.float32)
    b2 = b2.at[:, :action_dim].set(params["ba2"])
    b2 = b2.at[:, action_dim:action_dim + 1].set(params["bv2"])

    return dict(w1=w1.astype(mxu_dtype), b1=b1,
                w2=w2.astype(mxu_dtype), b2=b2)


def actor_critic_forward(x, packed, action_dim, *, block_b=1024,
                         out_dtype=jnp.float32, return_packed=False):
    """Fused actor+critic forward.

    return_packed=False -> (probs (B, A), value (B, 1))       [convenience]
    return_packed=True  -> packed (B, 128) slab, lanes [0,A) = probs, lane A =
                           value (recommended: avoids two extra HBM passes from
                           post-kernel slicing for large B).
    """
    assert action_dim + 1 <= OUT_PAD
    B, state_dim = x.shape
    mxu_dtype = packed["w1"].dtype
    x = x.astype(mxu_dtype)

    # Batch tile: big enough to amortize the ~0.35 us per-grid-step overhead,
    # small enough to stay well under the 32 MiB vmem_limit set below.
    TB = min(block_b, _round_up(B, 8))
    # v7x: prefer >=2 grid steps so the "parallel" batch axis can shard across
    # both TensorCores (no-op on v5e/v6e; skipped for tiny batches).
    if pl.cdiv(B, TB) < 2 and B >= 16:
        TB = _round_up(pl.cdiv(B, 2), 8)
    grid = (pl.cdiv(B, TB),)   # ragged last block handled by Pallas; no jnp.pad

    mxu_bytes = jnp.dtype(mxu_dtype).itemsize
    out_bytes = jnp.dtype(out_dtype).itemsize
    weight_bytes = ((state_dim + OUT_PAD) * 2 * HIDDEN_PAD) * mxu_bytes \
                   + (2 * HIDDEN_PAD + OUT_PAD) * 4
    cost = pl.CostEstimate(
        flops=2 * B * (state_dim * 2 * HIDDEN_PAD + 2 * HIDDEN_PAD * OUT_PAD),
        transcendentals=B * OUT_PAD,
        bytes_accessed=B * (state_dim * mxu_bytes + OUT_PAD * out_bytes)
                       + weight_bytes,
    )

    kernel = functools.partial(_actor_critic_kernel, action_dim=action_dim)
    out = pl.pallas_call(
        kernel,
        out_shape=jax.ShapeDtypeStruct((B, OUT_PAD), out_dtype),
        grid=grid,
        in_specs=[
            pl.BlockSpec((TB, state_dim), lambda i: (i, 0)),              # x: streamed
            pl.BlockSpec((state_dim, 2 * HIDDEN_PAD), lambda i: (0, 0)),  # w1: resident
            pl.BlockSpec((1, 2 * HIDDEN_PAD), lambda i: (0, 0)),          # b1: resident
            pl.BlockSpec((2 * HIDDEN_PAD, OUT_PAD), lambda i: (0, 0)),    # w2: resident
            pl.BlockSpec((1, OUT_PAD), lambda i: (0, 0)),                 # b2: resident
        ],
        out_specs=pl.BlockSpec((TB, OUT_PAD), lambda i: (i, 0)),
        compiler_params=pltpu.CompilerParams(
            # batch axis is embarrassingly parallel -> v7x shards it over 2 TCs.
            dimension_semantics=("parallel",),
            # covers v5e's 16 MiB scoped-VMEM default for TB up to ~2048;
            # safely under physical VMEM on every generation.
            vmem_limit_bytes=32 * 1024 * 1024,
        ),
        cost_estimate=cost,
    )(x, packed["w1"], packed["b1"], packed["w2"], packed["b2"])

    if return_packed:
        return out
    return out[:, :action_dim], out[:, action_dim:action_dim + 1]


def init_params(key, state_dim, action_dim):
    """nn.Linear-default init (uniform(-1/sqrt(in), 1/sqrt(in))), transposed."""
    def linear(k, fan_in, fan_out):
        kw, kb = jax.random.split(k)
        bound = 1.0 / math.sqrt(fan_in)
        w = jax.random.uniform(kw, (fan_in, fan_out), jnp.float32, -bound, bound)
        b = jax.random.uniform(kb, (1, fan_out), jnp.float32, -bound, bound)
        return w, b

    k1, k2, k3, k4 = jax.random.split(key, 4)
    wa1, ba1 = linear(k1, state_dim, HIDDEN)
    wa2, ba2 = linear(k2, HIDDEN, action_dim)
    wv1, bv1 = linear(k3, state_dim, HIDDEN)
    wv2, bv2 = linear(k4, HIDDEN, 1)
    return dict(wa1=wa1, ba1=ba1, wa2=wa2, ba2=ba2,
                wv1=wv1, bv1=bv1, wv2=wv2, bv2=bv2)


def reference_forward(x, p):
    ha = jax.nn.relu(x @ p["wa1"] + p["ba1"])
    probs = jax.nn.softmax(ha @ p["wa2"] + p["ba2"], axis=1)
    hv = jax.nn.relu(x @ p["wv1"] + p["bv1"])
    value = hv @ p["wv2"] + p["bv2"]
    return probs, value


# TODO(synk): act()/evaluate() (Categorical sampling, log_prob, entropy) are
# host-side distribution utilities, not part of the network forward; they are
# intentionally left outside the kernel.

if __name__ == "__main__":
    key = jax.random.PRNGKey(0)
    kx, kx2, kp = jax.random.split(key, 3)

    batch, state_dim, action_dim = 8, 8, 4
    x = jax.random.normal(kx, (batch, state_dim), dtype=jnp.float32)
    params = init_params(kp, state_dim, action_dim)
    probs_ref, value_ref = reference_forward(x, params)

    # ---- f32 path (exact PyTorch semantics) ----
    packed_f32 = pack_params(params, action_dim, mxu_dtype=jnp.float32)
    probs, value = actor_critic_forward(x, packed_f32, action_dim)
    jax.block_until_ready((probs, value))

    assert probs.shape == (batch, action_dim) and value.shape == (batch, 1)
    assert jnp.allclose(probs, probs_ref, atol=1e-5, rtol=1e-5)
    assert jnp.allclose(value, value_ref, atol=1e-5, rtol=1e-5)
    assert jnp.allclose(jnp.sum(probs, axis=1), 1.0, atol=1e-5)

    # ---- ragged-batch / multi-step grid path (cdiv grid, no jnp.pad) ----
    batch2 = 20
    x2 = jax.random.normal(kx2, (batch2, state_dim), dtype=jnp.float32)
    probs2_ref, value2_ref = reference_forward(x2, params)
    slab = actor_critic_forward(x2, packed_f32, action_dim,
                                block_b=8, return_packed=True)
    jax.block_until_ready(slab)
    assert slab.shape == (batch2, OUT_PAD)
    assert jnp.allclose(slab[:, :action_dim], probs2_ref, atol=1e-5, rtol=1e-5)
    assert jnp.allclose(slab[:, action_dim:action_dim + 1], value2_ref,
                        atol=1e-5, rtol=1e-5)

    # ---- bf16-MXU + bf16-output path (v6e/v7x bandwidth optimization) ----
    # NOTE: probs/value lose ~3 decimal digits; fine for RL rollouts, document
    # for consumers that recompute log-probs from these probs.
    packed_bf16 = pack_params(params, action_dim)   # default mxu_dtype=bf16
    probs_b, value_b = actor_critic_forward(x, packed_bf16, action_dim,
                                            out_dtype=jnp.bfloat16)
    jax.block_until_ready((probs_b, value_b))

    assert jnp.allclose(probs_b.astype(jnp.float32), probs_ref,
                        atol=5e-2, rtol=5e-2)
    assert jnp.allclose(value_b.astype(jnp.float32), value_ref,
                        atol=5e-2, rtol=5e-2)
    assert jnp.allclose(jnp.sum(probs_b.astype(jnp.float32), axis=1), 1.0,
                        atol=2e-2)

    print("KERNEL_OK")
</pallas_src>

<mosaic_0001>
module attributes {stable_mosaic.version = 11 : i64} {
  func.func @_actor_critic_kernel(%arg0: i32, %arg1: memref<8x8xf32, #tpu.memory_space<vmem>>, %arg2: memref<8x256xf32, #tpu.memory_space<vmem>>, %arg3: memref<1x256xf32, #tpu.memory_space<vmem>>, %arg4: memref<256x128xf32, #tpu.memory_space<vmem>>, %arg5: memref<1x128xf32, #tpu.memory_space<vmem>>, %arg6: memref<8x128xf32, #tpu.memory_space<vmem>>) attributes {dimension_semantics = [#tpu.dimension_semantics<parallel>], iteration_bounds = array<i64: 1>, scalar_prefetch = 0 : i64, scratch_operands = 0 : i64, tpu.core_type = #tpu.core_type<tc>, window_params = [{transform_indices = @transform_0, window_bounds = array<i64: 8, 8>}, {pipeline_mode = #tpu.pipeline_mode<synchronous>, transform_indices = @transform_1, window_bounds = array<i64: 8, 256>}, {pipeline_mode = #tpu.pipeline_mode<synchronous>, transform_indices = @transform_2, window_bounds = array<i64: 1, 256>}, {pipeline_mode = #tpu.pipeline_mode<synchronous>, transform_indices = @transform_3, window_bounds = array<i64: 256, 128>}, {pipeline_mode = #tpu.pipeline_mode<synchronous>, transform_indices = @transform_4, window_bounds = array<i64: 1, 128>}, {transform_indices = @transform_5, window_bounds = array<i64: 8, 128>}]} {
    %c0 = arith.constant 0 : index
    %c0_0 = arith.constant 0 : index
    %0 = vector.load %arg1[%c0, %c0_0] : memref<8x8xf32, #tpu.memory_space<vmem>>, vector<8x8xf32>
    %c0_1 = arith.constant 0 : index
    %c0_2 = arith.constant 0 : index
    %1 = vector.load %arg2[%c0_1, %c0_2] : memref<8x256xf32, #tpu.memory_space<vmem>>, vector<8x256xf32>
    %cst = arith.constant dense<0.000000e+00> : vector<8x256xf32>
    %2 = tpu.matmul %0, %1, %cst {dimension_numbers = #tpu.dot_dimension_numbers<[1], [0], [0], [1], [0, 0, 1, 1], [], []>} : vector<8x8xf32>, vector<8x256xf32>, vector<8x256xf32> -> vector<8x256xf32>
    %c0_3 = arith.constant 0 : index
    %c0_4 = arith.constant 0 : index
    %3 = vector.load %arg3[%c0_3, %c0_4] : memref<1x256xf32, #tpu.memory_space<vmem>>, vector<1x256xf32>
    %4 = vector.broadcast %3 : vector<1x256xf32> to vector<8x256xf32>
    %5 = arith.addf %2, %4 : vector<8x256xf32>
    %cst_5 = arith.constant 0.000000e+00 : f32
    %6 = vector.broadcast %cst_5 : f32 to vector<8x256xf32>
    %7 = arith.maximumf %5, %6 : vector<8x256xf32>
    %c0_6 = arith.constant 0 : index
    %c0_7 = arith.constant 0 : index
    %8 = vector.load %arg4[%c0_6, %c0_7] : memref<256x128xf32, #tpu.memory_space<vmem>>, vector<256x128xf32>
    %cst_8 = arith.constant dense<0.000000e+00> : vector<8x128xf32>
    %9 = tpu.matmul %7, %8, %cst_8 {dimension_numbers = #tpu.dot_dimension_numbers<[1], [0], [0], [1], [0, 0, 1, 1], [], []>} : vector<8x256xf32>, vector<256x128xf32>, vector<8x128xf32> -> vector<8x128xf32>
    %c0_9 = arith.constant 0 : index
    %c0_10 = arith.constant 0 : index
    %10 = vector.load %arg5[%c0_9, %c0_10] : memref<1x128xf32, #tpu.memory_space<vmem>>, vector<1x128xf32>
    %11 = vector.broadcast %10 : vector<1x128xf32> to vector<8x128xf32>
    %12 = arith.addf %9, %11 : vector<8x128xf32>
    %13 = tpu.iota {dimensions = array<i32: 1>} : vector<8x128xi32>
    %c4_i32 = arith.constant 4 : i32
    %14 = vector.broadcast %c4_i32 : i32 to vector<8x128xi32>
    %15 = arith.cmpi slt, %13, %14 : vector<8x128xi32>
    %cst_11 = arith.constant 0xFF800000 : f32
    %16 = vector.broadcast %cst_11 : f32 to vector<8x128xf32>
    %17 = arith.select %15, %12, %16 : vector<8x128xi1>, vector<8x128xf32>
    %cst_12 = arith.constant dense<0xFF800000> : vector<8xf32>
    %18 = vector.multi_reduction <maximumf>, %17, %cst_12 [1] : vector<8x128xf32> to vector<8xf32>
    %19 = vector.shape_cast %18 : vector<8xf32> to vector<8x1xf32>
    %20 = vector.broadcast %19 : vector<8x1xf32> to vector<8x128xf32>
    %21 = arith.subf %17, %20 : vector<8x128xf32>
    %22 = math.exp %21 : vector<8x128xf32>
    %cst_13 = arith.constant dense<0.000000e+00> : vector<8xf32>
    %23 = vector.multi_reduction <add>, %22, %cst_13 [1] : vector<8x128xf32> to vector<8xf32>
    %24 = vector.shape_cast %23 : vector<8xf32> to vector<8x1xf32>
    %25 = tpu.reciprocal %24 {approx = true} : vector<8x1xf32> -> vector<8x1xf32>
    %26 = arith.mulf %24, %25 : vector<8x1xf32>
    %cst_14 = arith.constant 2.000000e+00 : f32
    %27 = vector.broadcast %cst_14 : f32 to vector<8x1xf32>
    %28 = arith.subf %27, %26 : vector<8x1xf32>
    %29 = arith.mulf %25, %28 : vector<8x1xf32>
    %30 = vector.broadcast %29 : vector<8x1xf32> to vector<8x128xf32>
    %31 = arith.mulf %22, %30 : vector<8x128xf32>
    %c4_i32_15 = arith.constant 4 : i32
    %32 = vector.broadcast %c4_i32_15 : i32 to vector<8x128xi32>
    %33 = arith.cmpi eq, %13, %32 : vector<8x128xi32>
    %cst_16 = arith.constant 0.000000e+00 : f32
    %34 = vector.broadcast %cst_16 : f32 to vector<8x128xf32>
    %35 = arith.select %33, %12, %34 : vector<8x128xi1>, vector<8x128xf32>
    %36 = arith.addf %31, %35 : vector<8x128xf32>
    %c0_17 = arith.constant 0 : index
    %c0_18 = arith.constant 0 : index
    %37 = vector.load %arg6[%c0_17, %c0_18] : memref<8x128xf32, #tpu.memory_space<vmem>>, vector<8x128xf32>
    tpu.vector_store %arg6[%c0_17, %c0_18], %36 {strides = array<i32>} : memref<8x128xf32, #tpu.memory_space<vmem>>, vector<8x128xf32>,
    return
  }
  func.func @transform_0(%arg0: i32) -> (i32, i32) {
    %c0_i32 = arith.constant 0 : i32
    %c0_i32_0 = arith.constant 0 : i32
    return %arg0, %c0_i32 : i32, i32
  }
  func.func @transform_1(%arg0: i32) -> (i32, i32) {
    %c0_i32 = arith.constant 0 : i32
    %c0_i32_0 = arith.constant 0 : i32
    %c0_i32_1 = arith.constant 0 : i32
    return %c0_i32, %c0_i32_0 : i32, i32
  }
  func.func @transform_2(%arg0: i32) -> (i32, i32) {
    %c0_i32 = arith.constant 0 : i32
    %c0_i32_0 = arith.constant 0 : i32
    %c0_i32_1 = arith.constant 0 : i32
    return %c0_i32, %c0_i32_0 : i32, i32
  }
  func.func @transform_3(%arg0: i32) -> (i32, i32) {
    %c0_i32 = arith.constant 0 : i32
    %c0_i32_0 = arith.constant 0 : i32
    %c0_i32_1 = arith.constant 0 : i32
    return %c0_i32, %c0_i32_0 : i32, i32
  }
  func.func @transform_4(%arg0: i32) -> (i32, i32) {
    %c0_i32 = arith.constant 0 : i32
    %c0_i32_0 = arith.constant 0 : i32
    %c0_i32_1 = arith.constant 0 : i32
    return %c0_i32, %c0_i32_0 : i32, i32
  }
  func.func @transform_5(%arg0: i32) -> (i32, i32) {
    %c0_i32 = arith.constant 0 : i32
    %c0_i32_0 = arith.constant 0 : i32
    return %arg0, %c0_i32 : i32, i32
  }
}

</mosaic_0001>

<llo_original>
// kernel: tpu_custom_call.1
$region0: #{tpu_custom_call.1}
  #allocation0 [shape = 'u32[]', space=smem, size = 0x4, offset = 0x4, fixed_abs, tag = 'smem constant byte address 0x4 - core index']
  #allocation1 [shape = 'u32[144,128]{1,0:T(1,128)}', space=vmem, size = 0x12000, scoped, tag = 'internal scratch']
  %s0 = inlined_call_operand.hbm [shape: f32[8,8], index: 0, kind: input, shape index: {}]
  %s1 = inlined_call_operand.hbm [shape: f32[8,256], index: 1, kind: input, shape index: {}]
  %s2 = inlined_call_operand.vmem [shape: f32[1,256], index: 2, kind: input, shape index: {}]
  %s3 = inlined_call_operand.hbm [shape: f32[256,128], index: 3, kind: input, shape index: {}]
  %s4 = inlined_call_operand.vmem [shape: f32[1,128], index: 4, kind: input, shape index: {}]
  %s5 = inlined_call_operand.hbm [shape: f32[8,128], index: 5, kind: output, shape index: {}]
  %s6 = sld [smem:[#allocation0]]
  $region42: #{tpu_custom_call.1} parent=0
    _
  %s8 = ssub.s32 1, %s6
  %s9 = scalar_select 0, %s8, %s6
  $region1: #{tpu_custom_call.1} parent=0
    #allocation2 [shape = 'u8[4096]{0}', space=vmem, size = 0x1000, scoped, tag = 'input window, operand 0, single buffered']
    #allocation3 [shape = 's32[1]{0}', space=sflag, size = 0x4, scoped, tag = 'scoped memory for tpu_custom_call.1']
    #allocation4 [shape = 's32[1]{0}', space=sflag, size = 0x4, scoped, tag = 'scoped memory for tpu_custom_call.1']
    #allocation5 [shape = 'u8[8192]{0}', space=vmem, size = 0x2000, scoped, tag = 'input window, operand 1, single buffered']
    #allocation6 [shape = 's32[1]{0}', space=sflag, size = 0x4, scoped, tag = 'scoped memory for tpu_custom_call.1']
    #allocation7 [shape = 'u8[131072]{0}', space=vmem, size = 0x20000, scoped, tag = 'input window, operand 3, single buffered']
    #allocation8 [shape = 'u8[4096]{0}', space=vmem, size = 0x1000, scoped, tag = 'output window, operand 0, single buffered']
    %10 = vsyncpa [#allocation3], 0
    %11 = vsyncpa [#allocation6], 0
    %12 = vsyncpa [#allocation4], 0
    // Predicated region
    $region2: #{tpu_custom_call.1} parent=1 // pred_check
      _
    $region3: #{tpu_custom_call.1} parent=1 // pred_check_branch
      %14 = sbr.rel (0) target = $region5
    $region4: #{tpu_custom_call.1} parent=1 // pred_region
      %s16 = ssub.s32 128, 128
      %17 = vsyncadd [#allocation3], %s16
      %s19 = sshll.u32 [#allocation2], 4
      %s20 = int_to_ptr.vmem [resolvable:$true] %s19
      %22 = dma.hbm_to_vmem [thread:$0]  %s0, 128, %s20, [#allocation3]
    $region5: #{tpu_custom_call.1} parent=1 // pred_fallthru
      _
    // Predicated region
    $region6: #{tpu_custom_call.1} parent=1 // pred_check
      _
    $region7: #{tpu_custom_call.1} parent=1 // pred_check_branch
      %24 = sbr.rel (0) target = $region9
    $region8: #{tpu_custom_call.1} parent=1 // pred_region
      %s26 = ssub.s32 256, 256
      %27 = vsyncadd [#allocation6], %s26
      %s29 = sshll.u32 [#allocation5], 4
      %s30 = int_to_ptr.vmem [resolvable:$true] %s29
      %32 = dma.hbm_to_vmem [thread:$0]  %s1, 256, %s30, [#allocation6]
    $region9: #{tpu_custom_call.1} parent=1 // pred_fallthru
      _
    // Predicated region
    $region10: #{tpu_custom_call.1} parent=1 // pred_check
      _
    $region11: #{tpu_custom_call.1} parent=1 // pred_check_branch
      %34 = sbr.rel (0) target = $region13
    $region12: #{tpu_custom_call.1} parent=1 // pred_region
      _
    $region13: #{tpu_custom_call.1} parent=1 // pred_fallthru
      _
    // Predicated region
    $region14: #{tpu_custom_call.1} parent=1 // pred_check
      _
    $region15: #{tpu_custom_call.1} parent=1 // pred_check_branch
      %36 = sbr.rel (0) target = $region17
    $region16: #{tpu_custom_call.1} parent=1 // pred_region
      %s38 = ssub.s32 4096, 4096
      %39 = vsyncadd [#allocation6], %s38
      %s40 = sshll.u32 [#allocation7], 4
      %s41 = int_to_ptr.vmem [resolvable:$true] %s40
      %46 = dma.hbm_to_vmem [thread:$0]  %s3, 4096, %s41, [#allocation6], 128, 128, 8
    $region17: #{tpu_custom_call.1} parent=1 // pred_fallthru
      _
    // Predicated region
    $region18: #{tpu_custom_call.1} parent=1 // pred_check
      _
    $region19: #{tpu_custom_call.1} parent=1 // pred_check_branch
      %48 = sbr.rel (0) target = $region21
    $region20: #{tpu_custom_call.1} parent=1 // pred_region
      _
    $region21: #{tpu_custom_call.1} parent=1 // pred_fallthru
      _
    // Predicated region
    $region22: #{tpu_custom_call.1} parent=1 // pred_check
      _
    $region23: #{tpu_custom_call.1} parent=1 // pred_check_branch
      %50 = sbr.rel (0) target = $region25
    $region24: #{tpu_custom_call.1} parent=1 // pred_region
      %51 = dma.done [#allocation3], 128
    $region25: #{tpu_custom_call.1} parent=1 // pred_fallthru
      _
    // Predicated region
    $region26: #{tpu_custom_call.1} parent=1 // pred_check
      _
    $region27: #{tpu_custom_call.1} parent=1 // pred_check_branch
      %53 = sbr.rel (0) target = $region29
    $region28: #{tpu_custom_call.1} parent=1 // pred_region
      %54 = dma.done [#allocation6], 256
    $region29: #{tpu_custom_call.1} parent=1 // pred_fallthru
      _
    // Predicated region
    $region30: #{tpu_custom_call.1} parent=1 // pred_check
      _
    $region31: #{tpu_custom_call.1} parent=1 // pred_check_branch
      %56 = sbr.rel (0) target = $region33
    $region32: #{tpu_custom_call.1} parent=1 // pred_region
      %57 = dma.done [#allocation6], 4096
    $region33: #{tpu_custom_call.1} parent=1 // pred_fallthru
      _
    %v58 = vld [vmem:[#allocation2] sm:$0xff]
    %v59 = vld [vmem:[#allocation5] sm:$0xff]
    %v60 = vld [vmem:[#allocation5 + $0x8] sm:$0xff]
    %v61 = vld [vmem:[%s2] sm:$0x3]
    %v63 = vlaneseq
    %v64 = vshrl.u32 %v63, 7
    %v65 = vsub.s32 0, %v64
    %v66 = vrot.slane %v61, %v65
    %v67 = vlaneseq
    %v68 = vshrl.u32 %v67, 7
    %v69 = vsub.s32 1, %v68
    %v70 = vrot.slane %v61, %v69
    %vm73 = vcmask 64512
    %v75 = vsel %vm73, %v58, 0
    %77 = vmatprep.subr.mxu0 %v60
    %78 = vmatpush1.msra.mxu0 %v59
    %79 = vmatprep.subr.mxu0 0.0
    %80 = vmatpush1.msra.mxu0 0.0
    %81 = vmatprep.subr.mxu0 0.0
    %82 = vmatpush1.msra.mxu0 0.0
    %83 = vmatprep.subr.mxu0 0.0
    %84 = vmatpush1.msra.mxu0 0.0
    %85 = vmatprep.subr.mxu0 0.0
    %86 = vmatpush1.msra.mxu0 0.0
    %87 = vmatprep.subr.mxu0 0.0
    %88 = vmatpush1.msra.mxu0 0.0
    %89 = vmatprep.subr.mxu0 0.0
    %90 = vmatpush1.msra.mxu0 0.0
    %91 = vmatprep.subr.mxu0 0.0
    %92 = vmatpush1.msra.mxu0 0.0
    %93 = vmatprep.subr.mxu0 0.0
    %94 = vmatpush1.msra.mxu0 0.0
    %95 = vmatprep.subr.mxu0 0.0
    %96 = vmatpush1.msra.mxu0 0.0
    %97 = vmatprep.subr.mxu0 0.0
    %98 = vmatpush1.msra.mxu0 0.0
    %99 = vmatprep.subr.mxu0 0.0
    %100 = vmatpush1.msra.mxu0 0.0
    %101 = vmatprep.subr.mxu0 0.0
    %102 = vmatpush1.msra.mxu0 0.0
    %103 = vmatprep.subr.mxu0 0.0
    %104 = vmatpush1.msra.mxu0 0.0
    %105 = vmatprep.subr.mxu0 0.0
    %106 = vmatpush1.msra.mxu0 0.0
    %107 = vmatprep.subr.mxu0 0.0
    %108 = vmatpush1.msra.mxu0 0.0
    %109 = vmatprep.subr.mxu0 0.0
    %110 = vmatpush1.msra.mxu0 0.0
    %111 = vmatprep.subr.mxu0 0.0
    %112 = vmatpush1.msra.mxu0 0.0
    %113 = vmatprep.subr.mxu0 0.0
    %114 = vmatpush1.msra.mxu0 0.0
    %115 = vmatprep.subr.mxu0 0.0
    %116 = vmatpush1.msra.mxu0 0.0
    %117 = vmatprep.subr.mxu0 0.0
    %118 = vmatpush1.msra.mxu0 0.0
    %119 = vmatprep.subr.mxu0 0.0
    %120 = vmatpush1.msra.mxu0 0.0
    %121 = vmatprep.subr.mxu0 0.0
    %122 = vmatpush1.msra.mxu0 0.0
    %123 = vmatprep.subr.mxu0 0.0
    %124 = vmatpush1.msra.mxu0 0.0
    %125 = vmatprep.subr.mxu0 0.0
    %126 = vmatpush1.msra.mxu0 0.0
    %127 = vmatprep.subr.mxu0 0.0
    %128 = vmatpush1.msra.mxu0 0.0
    %129 = vmatprep.subr.mxu0 0.0
    %130 = vmatpush1.msra.mxu0 0.0
    %131 = vmatprep.subr.mxu0 0.0
    %132 = vmatpush1.msra.mxu0 0.0
    %133 = vmatprep.subr.mxu0 0.0
    %134 = vmatpush1.msra.mxu0 0.0
    %135 = vmatprep.subr.mxu0 0.0
    %136 = vmatpush1.msra.mxu0 0.0
    %137 = vmatprep.subr.mxu0 0.0
    %138 = vmatpush1.msra.mxu0 0.0
    %139 = vmatprep.subr.mxu0 0.0
    %140 = vmatpush1.msra.mxu0 0.0
    %141 = vmatprep.mubr.f32.mxu0 0.0
    %142 = vmatmul.mubr.f32.gmra.mrb[0].mxu0 %v75
    %v143 = vpop.f32.mrb[0].mxu0
    %v144 = vadd.f32 %v66, %v143
    %v145 = vpop.f32.mrb[0].mxu0
    %v146 = vadd.f32 %v70, %v145
    %147 = vdwg.mxu0
    %v148 = vmax.f32 %v144, 0.0
    %v149 = vmax.f32 %v146, 0.0
    %v150 = vld [vmem:[#allocation7] sm:$0xff]
    %v151 = vld [vmem:[#allocation7 + $0x8] sm:$0xff]
    %v152 = vld [vmem:[#allocation7 + $0x10] sm:$0xff]
    %v153 = vld [vmem:[#allocation7 + $0x18] sm:$0xff]
    %v154 = vld [vmem:[#allocation7 + $0x20] sm:$0xff]
    %v155 = vld [vmem:[#allocation7 + $0x28] sm:$0xff]
    %v156 = vld [vmem:[#allocation7 + $0x30] sm:$0xff]
    %v157 = vld [vmem:[#allocation7 + $0x38] sm:$0xff]
    %v158 = vld [vmem:[#allocation7 + $0x40] sm:$0xff]
    %v159 = vld [vmem:[#allocation7 + $0x48] sm:$0xff]
    %v160 = vld [vmem:[#allocation7 + $0x50] sm:$0xff]
    %v161 = vld [vmem:[#allocation7 + $0x58] sm:$0xff]
    %v162 = vld [vmem:[#allocation7 + $0x60] sm:$0xff]
    %v163 = vld [vmem:[#allocation7 + $0x68] sm:$0xff]
    %v164 = vld [vmem:[#allocation7 + $0x70] sm:$0xff]
    %v165 = vld [vmem:[#allocation7 + $0x78] sm:$0xff]
    %v166 = vld [vmem:[#allocation7 + $0x80] sm:$0xff]
    %v167 = vld [vmem:[#allocation7 + $0x88] sm:$0xff]
    %v168 = vld [vmem:[#allocation7 + $0x90] sm:$0xff]
    %v169 = vld [vmem:[#allocation7 + $0x98] sm:$0xff]
    %v170 = vld [vmem:[#allocation7 + $0xa0] sm:$0xff]
    %v171 = vld [vmem:[#allocation7 + $0xa8] sm:$0xff]
    %v172 = vld [vmem:[#allocation7 + $0xb0] sm:$0xff]
    %v173 = vld [vmem:[#allocation7 + $0xb8] sm:$0xff]
    %v174 = vld [vmem:[#allocation7 + $0xc0] sm:$0xff]
    %v175 = vld [vmem:[#allocation7 + $0xc8] sm:$0xff]
    %v176 = vld [vmem:[#allocation7 + $0xd0] sm:$0xff]
    %v177 = vld [vmem:[#allocation7 + $0xd8] sm:$0xff]
    %v178 = vld [vmem:[#allocation7 + $0xe0] sm:$0xff]
    %v179 = vld [vmem:[#allocation7 + $0xe8] sm:$0xff]
    %v180 = vld [vmem:[#allocation7 + $0xf0] sm:$0xff]
    %v181 = vld [vmem:[#allocation7 + $0xf8] sm:$0xff]
    %v182 = vld [vmem:[%s4] sm:$0x1]
    %v184 = vlaneseq
    %v185 = vshrl.u32 %v184, 7
    %v186 = vsub.s32 0, %v185
    %v187 = vrot.slane %v182, %v186
    %189 = vmatprep.subr.mxu0 0.0
    %190 = vmatpush1.msra.mxu0 %v150
    %191 = vmatprep.subr.mxu0 0.0
    %192 = vmatpush1.msra.mxu0 %v151
    %193 = vmatprep.subr.mxu0 0.0
    %194 = vmatpush1.msra.mxu0 %v152
    %195 = vmatprep.subr.mxu0 0.0
    %196 = vmatpush1.msra.mxu0 %v153
    %197 = vmatprep.subr.mxu0 0.0
    %198 = vmatpush1.msra.mxu0 %v154
    %199 = vmatprep.subr.mxu0 0.0
    %200 = vmatpush1.msra.mxu0 %v155
    %201 = vmatprep.subr.mxu0 0.0
    %202 = vmatpush1.msra.mxu0 %v156
    %203 = vmatprep.subr.mxu0 0.0
    %204 = vmatpush1.msra.mxu0 %v157
    %205 = vmatprep.subr.mxu0 0.0
    %206 = vmatpush1.msra.mxu0 %v158
    %207 = vmatprep.subr.mxu0 0.0
    %208 = vmatpush1.msra.mxu0 %v159
    %209 = vmatprep.subr.mxu0 0.0
    %210 = vmatpush1.msra.mxu0 %v160
    %211 = vmatprep.subr.mxu0 0.0
    %212 = vmatpush1.msra.mxu0 %v161
    %213 = vmatprep.subr.mxu0 0.0
    %214 = vmatpush1.msra.mxu0 %v162
    %215 = vmatprep.subr.mxu0 0.0
    %216 = vmatpush1.msra.mxu0 %v163
    %217 = vmatprep.subr.mxu0 0.0
    %218 = vmatpush1.msra.mxu0 %v164
    %219 = vmatprep.subr.mxu0 0.0
    %220 = vmatpush1.msra.mxu0 %v165
    %221 = vmatprep.subr.mxu0 0.0
    %222 = vmatpush1.msra.mxu0 %v166
    %223 = vmatprep.subr.mxu0 0.0
    %224 = vmatpush1.msra.mxu0 %v167
    %225 = vmatprep.subr.mxu0 0.0
    %226 = vmatpush1.msra.mxu0 %v168
    %227 = vmatprep.subr.mxu0 0.0
    %228 = vmatpush1.msra.mxu0 %v169
    %229 = vmatprep.subr.mxu0 0.0
    %230 = vmatpush1.msra.mxu0 %v170
    %231 = vmatprep.subr.mxu0 0.0
    %232 = vmatpush1.msra.mxu0 %v171
    %233 = vmatprep.subr.mxu0 0.0
    %234 = vmatpush1.msra.mxu0 %v172
    %235 = vmatprep.subr.mxu0 0.0
    %236 = vmatpush1.msra.mxu0 %v173
    %237 = vmatprep.subr.mxu0 0.0
    %238 = vmatpush1.msra.mxu0 %v174
    %239 = vmatprep.subr.mxu0 0.0
    %240 = vmatpush1.msra.mxu0 %v175
    %241 = vmatprep.subr.mxu0 0.0
    %242 = vmatpush1.msra.mxu0 %v176
    %243 = vmatprep.subr.mxu0 0.0
    %244 = vmatpush1.msra.mxu0 %v177
    %245 = vmatprep.subr.mxu0 0.0
    %246 = vmatpush1.msra.mxu0 %v178
    %247 = vmatprep.subr.mxu0 0.0
    %248 = vmatpush1.msra.mxu0 %v179
    %249 = vmatprep.subr.mxu0 0.0
    %250 = vmatpush1.msra.mxu0 %v180
    %251 = vmatprep.subr.mxu0 0.0
    %252 = vmatpush1.msra.mxu0 %v181
    %253 = vmatprep.mubr.f32.mxu0 %v149
    %254 = vmatmul.mubr.f32.gmra.mrb[0].mxu0 %v148
    %v255 = vpop.f32.mrb[0].mxu0
    %v256 = vadd.f32 %v187, %v255
    %v257 = vpop.f32.mrb[0].mxu0
    %258 = vdwg.mxu0
    %v259 = vlaneseq
    %v260 = vand.u32 %v259, 127
    %vm261 = vcmp.lt.s32.totalorder %v260, 4
    %v262 = vsel %vm261, %v256, -inf
    %263 = vmax.xlane.f32.xlu0 %v262
    %v264 = vpop.xlane.xlu0 %263
    %v265 = vsub.f32 %v262, %v264
    %v266 = vmul.f32 %v265, 1.442695
    %v267 = vpow.pop %v266
    %268 = vadd.xlane.f32.xlu0 %v267
    %v269 = vpop.xlane.xlu0 %268
    %v270 = vrcp.pop %v269
    %v271 = vmul.f32 %v269, %v270
    %v272 = vsub.f32 2.0, %v271
    %v273 = vmul.f32 %v270, %v272
    %v274 = vmul.f32 %v267, %v273
    %vm275 = vcmp.eq.s32.totalorder %v260, 4
    %v276 = vsel %vm275, %v256, 0.0
    %v277 = vadd.f32 %v274, %v276
    %278 = vst [vmem:[#allocation8] sm:$0xff] %v277
    // Predicated region
    $region34: #{tpu_custom_call.1} parent=1 // pred_check
      _
    $region35: #{tpu_custom_call.1} parent=1 // pred_check_branch
      %280 = sbr.rel (0) target = $region37
    $region36: #{tpu_custom_call.1} parent=1 // pred_region
      %s282 = ssub.s32 128, 128
      %283 = vsyncadd [#allocation4], %s282
      %s285 = sshll.u32 [#allocation8], 4
      %s286 = int_to_ptr.vmem [resolvable:$true] %s285
      %288 = dma.vmem_to_hbm [thread:$0]  %s286, 128, %s5, [#allocation4]
    $region37: #{tpu_custom_call.1} parent=1 // pred_fallthru
      _
    // Predicated region
    $region38: #{tpu_custom_call.1} parent=1 // pred_check
      _
    $region39: #{tpu_custom_call.1} parent=1 // pred_check_branch
      %290 = sbr.rel (0) target = $region41
    $region40: #{tpu_custom_call.1} parent=1 // pred_region
      %291 = dma.done [#allocation4], 128
    $region41: #{tpu_custom_call.1} parent=1 // pred_fallthru
      _
    %292 = vsyncpa [#allocation3], 1
    %293 = vsyncpa [#allocation6], 1
    %294 = vsyncpa [#allocation4], 1

</llo_original>
